<compile_context>
chip_gen: v6e
topology: v6e:2x2x1
jax: 0.10.0
libtpu: 0.0.40
codegen_flags: <defaults>
</compile_context>

<pallas_src>
import functools

import jax
import jax.numpy as jnp
from jax.experimental import pallas as pl
from jax.experimental.pallas import tpu as pltpu


# ---------------------------------------------------------------------------
# Kernels
# ---------------------------------------------------------------------------
def _lv_rhs_kernel(params_ref, z_ref, out_ref):
    # params_ref: SMEM (4,)  -> [alpha, beta, gamma, delta]
    # z_ref:      VMEM (2, TB, TN)
    # out_ref:    VMEM (2, TB, TN)
    alpha = params_ref[0]
    beta = params_ref[1]
    gamma = params_ref[2]
    delta = params_ref[3]

    x = z_ref[0]  # (TB, TN)
    y = z_ref[1]  # (TB, TN)

    # Factored form: 6 VALU ops/element instead of 7.
    out_ref[0] = x * (alpha - beta * y)
    out_ref[1] = y * (delta * x - gamma)


def _lv_rk4_kernel(params_ref, z_ref, out_ref, *, n_steps):
    # params_ref: SMEM (5,) -> [alpha, beta, gamma, delta, dt]
    # z_ref/out_ref: VMEM (2, TB, TN)
    # Runs n_steps of classic RK4 entirely inside one pallas_call so the
    # ~0.35 us/step launch overhead is paid once, not per RHS evaluation.
    alpha = params_ref[0]
    beta = params_ref[1]
    gamma = params_ref[2]
    delta = params_ref[3]
    dt = params_ref[4]

    def rhs(x, y):
        return x * (alpha - beta * y), y * (delta * x - gamma)

    def step(_, carry):
        x, y = carry
        k1x, k1y = rhs(x, y)
        k2x, k2y = rhs(x + 0.5 * dt * k1x, y + 0.5 * dt * k1y)
        k3x, k3y = rhs(x + 0.5 * dt * k2x, y + 0.5 * dt * k2y)
        k4x, k4y = rhs(x + dt * k3x, y + dt * k3y)
        x = x + (dt / 6.0) * (k1x + 2.0 * k2x + 2.0 * k3x + k4x)
        y = y + (dt / 6.0) * (k1y + 2.0 * k2y + 2.0 * k3y + k4y)
        return x, y

    x, y = jax.lax.fori_loop(0, n_steps, step, (z_ref[0], z_ref[1]))
    out_ref[0] = x
    out_ref[1] = y


# ---------------------------------------------------------------------------
# Tiling helpers
# ---------------------------------------------------------------------------
_TB_CAP = 256    # sublane-axis tile cap (multiple of 8)
_TN_CAP = 512    # lane-axis tile cap (multiple of 128)
_VMEM_LIMIT = 32 * 1024 * 1024  # safe on v5e/v6e/v7x scoped VMEM budgets


def _tile_sizes(B, N):
    # Use the full dim when it is small (satisfies the "equal full dim" rule),
    # otherwise a cap that is a multiple of (8, 128).
    tb = B if B <= _TB_CAP else _TB_CAP
    tn = N if N <= _TN_CAP else _TN_CAP
    return tb, tn


def _make_specs(B, N):
    tb, tn = _tile_sizes(B, N)
    grid = (pl.cdiv(B, tb), pl.cdiv(N, tn))
    block = pl.BlockSpec((2, tb, tn), lambda i, j: (0, i, j))
    param_spec = pl.BlockSpec(memory_space=pltpu.MemorySpace.SMEM)
    cparams = pltpu.CompilerParams(
        dimension_semantics=("parallel", "parallel"),
        vmem_limit_bytes=_VMEM_LIMIT,
    )
    return grid, block, param_spec, cparams


# ---------------------------------------------------------------------------
# Wrappers
# ---------------------------------------------------------------------------
def lotka_volterra_ode(t, z, params):
    """Pallas equivalent of LotkaVolterraODE.forward(t, z).

    t is accepted (and ignored) to match the PyTorch signature.
    z: (2, B, N) float32; params: (4,) float32 = [alpha, beta, gamma, delta].
    """
    del t  # unused, matches reference semantics
    _, B, N = z.shape
    grid, block, param_spec, cparams = _make_specs(B, N)
    cost = pl.CostEstimate(
        flops=6 * B * N,
        transcendentals=0,
        bytes_accessed=4 * (2 * B * N) * 2,  # read z + write out, f32
    )
    return pl.pallas_call(
        _lv_rhs_kernel,
        out_shape=jax.ShapeDtypeStruct(z.shape, z.dtype),
        grid=grid,
        in_specs=[param_spec, block],
        out_specs=block,
        compiler_params=cparams,
        cost_estimate=cost,
    )(params, z)


def lotka_volterra_rk4(z0, params, dt, n_steps):
    """Fused integrator: n_steps of RK4 on the LV system in ONE pallas_call.

    z0: (2, B, N) float32; params: (4,) f32; dt: python/f32 scalar;
    n_steps: static python int. Returns the state after n_steps.
    """
    _, B, N = z0.shape
    grid, block, param_spec, cparams = _make_specs(B, N)
    params5 = jnp.concatenate(
        [params.astype(jnp.float32), jnp.array([dt], dtype=jnp.float32)]
    )
    cost = pl.CostEstimate(
        flops=34 * n_steps * B * N,            # ~4 RHS evals + combine per step
        transcendentals=0,
        bytes_accessed=4 * (2 * B * N) * 2,    # state in + state out, f32
    )
    return pl.pallas_call(
        functools.partial(_lv_rk4_kernel, n_steps=n_steps),
        out_shape=jax.ShapeDtypeStruct(z0.shape, z0.dtype),
        grid=grid,
        in_specs=[param_spec, block],
        out_specs=block,
        compiler_params=cparams,
        cost_estimate=cost,
    )(params5, z0)


# ---------------------------------------------------------------------------
# Pure-JAX references
# ---------------------------------------------------------------------------
def lotka_volterra_ref(t, z, params):
    del t
    alpha, beta, gamma, delta = params[0], params[1], params[2], params[3]
    x, y = z[0], z[1]
    dxdt = alpha * x - beta * x * y
    dydt = delta * x * y - gamma * y
    return jnp.stack([dxdt, dydt])


def rk4_ref(z0, params, dt, n_steps):
    alpha, beta, gamma, delta = params[0], params[1], params[2], params[3]
    dt = jnp.float32(dt)

    def rhs(x, y):
        return x * (alpha - beta * y), y * (delta * x - gamma)

    def step(_, carry):
        x, y = carry
        k1x, k1y = rhs(x, y)
        k2x, k2y = rhs(x + 0.5 * dt * k1x, y + 0.5 * dt * k1y)
        k3x, k3y = rhs(x + 0.5 * dt * k2x, y + 0.5 * dt * k2y)
        k4x, k4y = rhs(x + dt * k3x, y + dt * k3y)
        x = x + (dt / 6.0) * (k1x + 2.0 * k2x + 2.0 * k3x + k4x)
        y = y + (dt / 6.0) * (k1y + 2.0 * k2y + 2.0 * k3y + k4y)
        return x, y

    x, y = jax.lax.fori_loop(0, n_steps, step, (z0[0], z0[1]))
    return jnp.stack([x, y])


# ---------------------------------------------------------------------------
# Demo / check
# ---------------------------------------------------------------------------
if __name__ == "__main__":
    key = jax.random.PRNGKey(0)
    B, N = 8, 128  # one vreg of trajectories per species (small demo shape)

    # Classic LV parameter values (module __init__ args).
    params = jnp.array([1.1, 0.4, 0.4, 0.1], dtype=jnp.float32)

    # Positive populations.
    z = jax.random.uniform(key, (2, B, N), dtype=jnp.float32,
                           minval=0.1, maxval=5.0)
    t = jnp.float32(0.0)

    # 1) RHS kernel == module forward semantics.
    out = jax.block_until_ready(lotka_volterra_ode(t, z, params))
    ref = lotka_volterra_ref(t, z, params)
    assert out.shape == z.shape and out.dtype == z.dtype
    assert jnp.allclose(out, ref, atol=1e-5, rtol=1e-5)

    # 2) Fused RK4 integrator kernel (overhead-amortized structural variant).
    dt, n_steps = 0.01, 64
    zT = jax.block_until_ready(lotka_volterra_rk4(z, params, dt, n_steps))
    zT_ref = rk4_ref(z, params, dt, n_steps)
    assert zT.shape == z.shape and zT.dtype == z.dtype
    assert jnp.allclose(zT, zT_ref, atol=1e-4, rtol=1e-4)

    print("KERNEL_OK")
</pallas_src>

<mosaic_0001>
module attributes {stable_mosaic.version = 11 : i64} {
  func.func @_lv_rhs_kernel(%arg0: i32, %arg1: i32, %arg2: memref<4xf32, #tpu.memory_space<smem>>, %arg3: memref<2x8x128xf32, #tpu.memory_space<vmem>>, %arg4: memref<2x8x128xf32, #tpu.memory_space<vmem>>) attributes {dimension_semantics = [#tpu.dimension_semantics<parallel>, #tpu.dimension_semantics<parallel>], iteration_bounds = array<i64: 1, 1>, scalar_prefetch = 0 : i64, scratch_operands = 0 : i64, tpu.core_type = #tpu.core_type<tc>, window_params = [{transform_indices = @transform_0, window_bounds = array<i64: 4>}, {transform_indices = @transform_1, window_bounds = array<i64: 2, 8, 128>}, {transform_indices = @transform_2, window_bounds = array<i64: 2, 8, 128>}]} {
    %c0 = arith.constant 0 : index
    %0 = memref.load %arg2[%c0] : memref<4xf32, #tpu.memory_space<smem>>
    %c1 = arith.constant 1 : index
    %1 = memref.load %arg2[%c1] : memref<4xf32, #tpu.memory_space<smem>>
    %c2 = arith.constant 2 : index
    %2 = memref.load %arg2[%c2] : memref<4xf32, #tpu.memory_space<smem>>
    %c3 = arith.constant 3 : index
    %3 = memref.load %arg2[%c3] : memref<4xf32, #tpu.memory_space<smem>>
    %c0_0 = arith.constant 0 : index
    %c0_1 = arith.constant 0 : index
    %c0_2 = arith.constant 0 : index
    %4 = vector.load %arg3[%c0_0, %c0_1, %c0_2] : memref<2x8x128xf32, #tpu.memory_space<vmem>>, vector<1x8x128xf32>
    %5 = vector.shape_cast %4 : vector<1x8x128xf32> to vector<8x128xf32>
    %c1_3 = arith.constant 1 : index
    %c0_4 = arith.constant 0 : index
    %c0_5 = arith.constant 0 : index
    %6 = vector.load %arg3[%c1_3, %c0_4, %c0_5] : memref<2x8x128xf32, #tpu.memory_space<vmem>>, vector<1x8x128xf32>
    %7 = vector.shape_cast %6 : vector<1x8x128xf32> to vector<8x128xf32>
    %8 = vector.broadcast %1 : f32 to vector<8x128xf32>
    %9 = arith.mulf %8, %7 : vector<8x128xf32>
    %10 = vector.broadcast %0 : f32 to vector<8x128xf32>
    %11 = arith.subf %10, %9 : vector<8x128xf32>
    %12 = arith.mulf %5, %11 : vector<8x128xf32>
    %c0_6 = arith.constant 0 : index
    %c0_7 = arith.constant 0 : index
    %c0_8 = arith.constant 0 : index
    %13 = vector.load %arg4[%c0_6, %c0_7, %c0_8] : memref<2x8x128xf32, #tpu.memory_space<vmem>>, vector<1x8x128xf32>
    %14 = vector.shape_cast %13 : vector<1x8x128xf32> to vector<8x128xf32>
    %15 = vector.shape_cast %12 : vector<8x128xf32> to vector<1x8x128xf32>
    tpu.vector_store %arg4[%c0_6, %c0_7, %c0_8], %15 {strides = array<i32>} : memref<2x8x128xf32, #tpu.memory_space<vmem>>, vector<1x8x128xf32>,
    %16 = vector.broadcast %3 : f32 to vector<8x128xf32>
    %17 = arith.mulf %16, %5 : vector<8x128xf32>
    %18 = vector.broadcast %2 : f32 to vector<8x128xf32>
    %19 = arith.subf %17, %18 : vector<8x128xf32>
    %20 = arith.mulf %7, %19 : vector<8x128xf32>
    %c1_9 = arith.constant 1 : index
    %c0_10 = arith.constant 0 : index
    %c0_11 = arith.constant 0 : index
    %21 = vector.load %arg4[%c1_9, %c0_10, %c0_11] : memref<2x8x128xf32, #tpu.memory_space<vmem>>, vector<1x8x128xf32>
    %22 = vector.shape_cast %21 : vector<1x8x128xf32> to vector<8x128xf32>
    %23 = vector.shape_cast %20 : vector<8x128xf32> to vector<1x8x128xf32>
    tpu.vector_store %arg4[%c1_9, %c0_10, %c0_11], %23 {strides = array<i32>} : memref<2x8x128xf32, #tpu.memory_space<vmem>>, vector<1x8x128xf32>,
    return
  }
  func.func @transform_0(%arg0: i32, %arg1: i32) -> i32 {
    %c0_i32 = arith.constant 0 : i32
    %c0_i32_0 = arith.constant 0 : i32
    return %c0_i32 : i32
  }
  func.func @transform_1(%arg0: i32, %arg1: i32) -> (i32, i32, i32) {
    %c0_i32 = arith.constant 0 : i32
    %c0_i32_0 = arith.constant 0 : i32
    return %c0_i32, %arg0, %arg1 : i32, i32, i32
  }
  func.func @transform_2(%arg0: i32, %arg1: i32) -> (i32, i32, i32) {
    %c0_i32 = arith.constant 0 : i32
    %c0_i32_0 = arith.constant 0 : i32
    return %c0_i32, %arg0, %arg1 : i32, i32, i32
  }
}

</mosaic_0001>

<llo_original>
// kernel: tpu_custom_call.1
$region0: #{tpu_custom_call.1}
  #allocation0 [shape = 'u32[]', space=smem, size = 0x4, offset = 0x4, fixed_abs, tag = 'smem constant byte address 0x4 - core index']
  #allocation1 [shape = 'u32[144,128]{1,0:T(1,128)}', space=vmem, size = 0x12000, scoped, tag = 'internal scratch']
  %s0 = inlined_call_operand.hbm [shape: f32[4], index: 0, kind: input, shape index: {}]
  %s1 = inlined_call_operand.hbm [shape: f32[2,8,128], index: 1, kind: input, shape index: {}]
  %s2 = inlined_call_operand.hbm [shape: f32[2,8,128], index: 2, kind: output, shape index: {}]
  %s3 = sld [smem:[#allocation0]]
  $region26: #{tpu_custom_call.1} parent=0
    _
  %s5 = ssub.s32 1, %s3
  %s6 = scalar_select 0, %s5, %s3
  $region1: #{tpu_custom_call.1} parent=0
    #allocation2 [shape = 'u8[512]{0}', space=smem, size = 0x200, scoped, tag = 'input window, operand 0, single buffered']
    #allocation3 [shape = 's32[1]{0}', space=sflag, size = 0x4, scoped, tag = 'scoped memory for tpu_custom_call.1']
    #allocation4 [shape = 's32[1]{0}', space=sflag, size = 0x4, scoped, tag = 'scoped memory for tpu_custom_call.1']
    #allocation5 [shape = 's32[1]{0}', space=sflag, size = 0x4, scoped, tag = 'scoped memory for tpu_custom_call.1']
    #allocation6 [shape = 'u8[8192]{0}', space=vmem, size = 0x2000, scoped, tag = 'input window, operand 1, single buffered']
    #allocation7 [shape = 'u8[8192]{0}', space=vmem, size = 0x2000, scoped, tag = 'output window, operand 0, single buffered']
    %7 = vsyncpa [#allocation5], 0
    %8 = vsyncpa [#allocation3], 0
    %9 = vsyncpa [#allocation4], 0
    // Predicated region
    $region2: #{tpu_custom_call.1} parent=1 // pred_check
      _
    $region3: #{tpu_custom_call.1} parent=1 // pred_check_branch
      %11 = sbr.rel (0) target = $region5
    $region4: #{tpu_custom_call.1} parent=1 // pred_region
      %s13 = ssub.s32 16, 16
      %14 = vsyncadd [#allocation5], %s13
      %17 = dma.hbm_to_smem %s0, 16, [#allocation2], [#allocation5]
    $region5: #{tpu_custom_call.1} parent=1 // pred_fallthru
      _
    // Predicated region
    $region6: #{tpu_custom_call.1} parent=1 // pred_check
      _
    $region7: #{tpu_custom_call.1} parent=1 // pred_check_branch
      %19 = sbr.rel (0) target = $region9
    $region8: #{tpu_custom_call.1} parent=1 // pred_region
      %s21 = ssub.s32 256, 256
      %22 = vsyncadd [#allocation3], %s21
      %s23 = sshll.u32 [#allocation6], 4
      %s24 = int_to_ptr.vmem [resolvable:$true] %s23
      %29 = dma.hbm_to_vmem [thread:$0]  %s1, 256, %s24, [#allocation3], 128, 128, 8
    $region9: #{tpu_custom_call.1} parent=1 // pred_fallthru
      _
    // Predicated region
    $region10: #{tpu_custom_call.1} parent=1 // pred_check
      _
    $region11: #{tpu_custom_call.1} parent=1 // pred_check_branch
      %31 = sbr.rel (0) target = $region13
    $region12: #{tpu_custom_call.1} parent=1 // pred_region
      %32 = dma.done [#allocation5], 16
    $region13: #{tpu_custom_call.1} parent=1 // pred_fallthru
      _
    // Predicated region
    $region14: #{tpu_custom_call.1} parent=1 // pred_check
      _
    $region15: #{tpu_custom_call.1} parent=1 // pred_check_branch
      %34 = sbr.rel (0) target = $region17
    $region16: #{tpu_custom_call.1} parent=1 // pred_region
      %35 = dma.done [#allocation3], 256
    $region17: #{tpu_custom_call.1} parent=1 // pred_fallthru
      _
    %36 = sfence
    %s37 = sld [smem:[#allocation2]]
    %s38 = sld [smem:[#allocation2 + $0x1]]
    %s39 = sld [smem:[#allocation2 + $0x2]]
    %s40 = sld [smem:[#allocation2 + $0x3]]
    %v41 = vld [vmem:[#allocation6] sm:$0xff]
    %s42 = scalar_lea.vmem [#allocation6], 8
    %v43 = vld [vmem:[%s42] sm:$0xff]
    %v44 = vstv %s38
    %v45 = vmul.f32 %v44, %v43
    %v46 = vstv %s37
    %v47 = vsub.f32 %v46, %v45
    %v48 = vmul.f32 %v41, %v47
    %49 = vst [vmem:[#allocation7] sm:$0xff] %v48
    %v50 = vstv %s40
    %v51 = vmul.f32 %v50, %v41
    %v52 = vstv %s39
    %v53 = vsub.f32 %v51, %v52
    %v54 = vmul.f32 %v43, %v53
    %s55 = scalar_lea.vmem [#allocation7], 8
    %56 = vst [vmem:[%s55] sm:$0xff] %v54
    // Predicated region
    $region18: #{tpu_custom_call.1} parent=1 // pred_check
      _
    $region19: #{tpu_custom_call.1} parent=1 // pred_check_branch
      %58 = sbr.rel (0) target = $region21
    $region20: #{tpu_custom_call.1} parent=1 // pred_region
      %s60 = ssub.s32 256, 256
      %61 = vsyncadd [#allocation4], %s60
      %s62 = sshll.u32 [#allocation7], 4
      %s63 = int_to_ptr.vmem [resolvable:$true] %s62
      %68 = dma.vmem_to_hbm [thread:$0]  %s63, 256, %s2, [#allocation4], 128, 128, 8
    $region21: #{tpu_custom_call.1} parent=1 // pred_fallthru
      _
    // Predicated region
    $region22: #{tpu_custom_call.1} parent=1 // pred_check
      _
    $region23: #{tpu_custom_call.1} parent=1 // pred_check_branch
      %70 = sbr.rel (0) target = $region25
    $region24: #{tpu_custom_call.1} parent=1 // pred_region
      %71 = dma.done [#allocation4], 256
    $region25: #{tpu_custom_call.1} parent=1 // pred_fallthru
      _
    %72 = vsyncpa [#allocation3], 1
    %73 = vsyncpa [#allocation4], 1
    %74 = vsyncpa [#allocation5], 1

</llo_original>
